<compile_context>
chip_gen: v6e
topology: v6e:2x2x1
jax: 0.10.0
libtpu: 0.0.40
codegen_flags: <defaults>
</compile_context>

<pallas_src>
import functools

import jax
import jax.numpy as jnp
from jax.experimental import pallas as pl
from jax.experimental.pallas import tpu as pltpu

_MIB = 1024 * 1024


def _round_up(x: int, m: int) -> int:
    return ((x + m - 1) // m) * m


def _vmem_capacity_bytes() -> int:
    """Physical VMEM per TensorCore; conservative (v7x-sized) fallback on failure."""
    try:
        info = pltpu.get_tpu_info()
        cap = getattr(info, "vmem_capacity_bytes", None)
        if cap:
            return int(cap)
    except Exception:
        pass
    return 64 * _MIB


def _choose_tile_n(n: int, c: int, dtype_bytes: int, row_align: int,
                   total_budget: int) -> int:
    # Per-row VMEM cost: double-buffered input tile plus ~3 (C,)-wide f32/int32
    # temporaries the compiler may materialize (f32 exp operand, iota, select).
    per_row = 2 * c * dtype_bytes + 3 * c * 4 + 16
    max_rows = max(row_align, total_budget // per_row)

    # Bytes-based cap per input buffer: past a few MiB the ~0.35us/grid-step overhead is
    # already amortized, and bigger buffers just eat VMEM (critical on v7x's 64 MiB).
    buf_cap_rows = max(row_align, (8 * _MIB) // (c * dtype_bytes))

    tile = min(max_rows, buf_cap_rows)

    # Keep at least 2 grid steps when the batch allows it (v7x: 2 TensorCores split a
    # "parallel" grid axis; a single tile would idle one of them).
    if n > 2 * row_align:
        tile = min(tile, _round_up(pl.cdiv(n, 2), row_align))

    # Never exceed the sublane-aligned batch.
    tile = min(tile, _round_up(n, row_align))

    tile = (tile // row_align) * row_align
    return max(tile, row_align)


def _make_focal_kernel(gamma: float, elementwise: bool, tile_n: int, n_valid: int):
    gamma_is_int = float(gamma).is_integer() and gamma >= 0
    ragged = (n_valid % tile_n) != 0

    def focal_kernel(logits_ref, target_ref, out_ref):
        x = logits_ref[...]                              # (TILE_N, C), native dtype
        t = target_ref[...]                              # (TILE_N, 1) int32

        # Row max in the native dtype (exact for bf16); f32 from here on.
        m = jnp.max(x, axis=-1, keepdims=True).astype(jnp.float32)      # (TILE_N, 1)

        # Streaming logsumexp denominator. The f32 cast has a single consumer, so the
        # cast/sub/exp chain fuses into the reduction (no materialized f32 tile).
        sum_exp = jnp.sum(jnp.exp(x.astype(jnp.float32) - m),
                          axis=-1, keepdims=True)                        # (TILE_N, 1)

        # Gather the (unshifted) target logit via iota+select in the native dtype
        # (exact: only one non-zero addend per row); fold the shift into logp.
        col = jax.lax.broadcasted_iota(jnp.int32, x.shape, 1)            # (TILE_N, C)
        tgt = jnp.sum(jnp.where(col == t, x, jnp.zeros((), x.dtype)),
                      axis=-1, keepdims=True).astype(jnp.float32)        # (TILE_N, 1)

        logp = jnp.log(sum_exp) + m - tgt                # per-sample cross entropy
        logp = jnp.maximum(logp, 0.0)                    # guard rounding-negative values
        p = jnp.exp(-logp)
        one_minus_p = jnp.maximum(1.0 - p, 0.0)          # keep pow base non-negative

        if gamma_is_int:
            g = int(gamma)
            if g == 0:
                focal = jnp.ones_like(one_minus_p)
            else:
                focal = one_minus_p
                for _ in range(g - 1):                   # default gamma=2: one extra mul
                    focal = focal * one_minus_p
        else:
            focal = one_minus_p ** gamma

        loss = focal * logp                              # (TILE_N, 1)

        if ragged:
            # Mask rows of the ragged edge block (no wrapper-side padding). Keep this a
            # select, NOT a multiply: out-of-bounds rows may hold Inf/NaN garbage.
            row = (pl.program_id(0) * tile_n
                   + jax.lax.broadcasted_iota(jnp.int32, (tile_n, 1), 0))
            loss = jnp.where(row < n_valid, loss, 0.0)

        if elementwise:
            out_ref[...] = loss                          # (TILE_N, 1) column, 4 B/sample
        else:
            # Per-tile partial sum, written lane-dense (4 KiB/tile, negligible); final
            # reduce happens in the wrapper so this grid axis stays "parallel".
            out_ref[...] = jnp.broadcast_to(jnp.sum(loss), (1, 8, 128))

    return focal_kernel


@functools.partial(jax.jit, static_argnames=("gamma", "eps", "elementwise"))
def focal_loss(logits, targets, gamma: float = 2.0, eps: float = 1e-7,
               elementwise: bool = False):
    """JAX/Pallas equivalent of FocalLoss.forward.

    logits:  (N, C) float array (f32 or bf16; bf16 is read from HBM as bf16)
    targets: (N,)   int array of class indices
    Note: `eps` is unused, matching the PyTorch forward (it never references self.eps).
    """
    n, c = logits.shape
    dtype_bytes = jnp.dtype(logits.dtype).itemsize
    row_align = max(8, 32 // dtype_bytes)        # 8 rows for f32, 16 for bf16 packing

    # Per-generation VMEM budget: v7x has 64 MiB/TC, v5e/v6e have 128 MiB.
    vmem_cap = _vmem_capacity_bytes()
    total_budget = min(3 * vmem_cap // 4, 96 * _MIB)          # 48 MiB on v7x, 96 MiB else
    vmem_limit = min(total_budget + 8 * _MIB, vmem_cap - 8 * _MIB)

    tile_n = _choose_tile_n(n, c, dtype_bytes, row_align, total_budget)
    num_tiles = pl.cdiv(n, tile_n)               # ragged edge handled in-kernel, no pad

    targets2d = targets.astype(jnp.int32).reshape(n, 1)

    if elementwise:
        out_shape = jax.ShapeDtypeStruct((n, 1), jnp.float32)
        out_spec = pl.BlockSpec((tile_n, 1), lambda i: (i, 0))
        out_bytes = n * 4
    else:
        out_shape = jax.ShapeDtypeStruct((num_tiles, 8, 128), jnp.float32)
        out_spec = pl.BlockSpec((1, 8, 128), lambda i: (i, 0, 0))
        out_bytes = num_tiles * 8 * 128 * 4

    kernel = _make_focal_kernel(gamma, elementwise, tile_n, n)

    cost = pl.CostEstimate(
        flops=6 * n * c,
        transcendentals=n * c + 3 * n,
        bytes_accessed=n * c * dtype_bytes + n * 4 + out_bytes,
    )

    result = pl.pallas_call(
        kernel,
        out_shape=out_shape,
        grid_spec=pltpu.PrefetchScalarGridSpec(
            num_scalar_prefetch=0,
            grid=(num_tiles,),
            in_specs=[
                pl.BlockSpec((tile_n, c), lambda i: (i, 0)),   # logits tile
                pl.BlockSpec((tile_n, 1), lambda i: (i, 0)),   # target tile
            ],
            out_specs=out_spec,
        ),
        compiler_params=pltpu.CompilerParams(
            dimension_semantics=("parallel",),   # no cross-tile state -> 2-TC friendly
            vmem_limit_bytes=vmem_limit,
        ),
        cost_estimate=cost,
    )(logits, targets2d)

    if elementwise:
        return result[:, 0]                      # (N,) per-sample losses
    return jnp.sum(result[:, 0, 0]) / n          # scalar mean over the true batch


def _reference(logits, targets, gamma=2.0, elementwise=False):
    """Pure-JAX reference for verification (f32 math, matching the kernel)."""
    logp_all = jax.nn.log_softmax(logits.astype(jnp.float32), axis=-1)
    logp = -jnp.take_along_axis(
        logp_all, targets[:, None].astype(jnp.int32), axis=-1)[:, 0]
    logp = jnp.maximum(logp, 0.0)
    p = jnp.exp(-logp)
    loss = jnp.maximum(1.0 - p, 0.0) ** gamma * logp
    return loss if elementwise else loss.mean()


if __name__ == "__main__":
    key = jax.random.PRNGKey(0)
    k1, k2, k3, k4, k5, k6 = jax.random.split(key, 6)

    # Small f32 case (default FocalLoss(): gamma=2, mean reduction).
    N, C = 8, 32
    logits = jax.random.normal(k1, (N, C), dtype=jnp.float32)
    targets = jax.random.randint(k2, (N,), 0, C, dtype=jnp.int32)

    out = jax.block_until_ready(focal_loss(logits, targets, gamma=2.0, elementwise=False))
    ref = _reference(logits, targets, gamma=2.0, elementwise=False)
    assert jnp.allclose(out, ref, atol=1e-5, rtol=1e-5), (out, ref)

    out_ew = jax.block_until_ready(focal_loss(logits, targets, gamma=2.0, elementwise=True))
    ref_ew = _reference(logits, targets, gamma=2.0, elementwise=True)
    assert jnp.allclose(out_ew, ref_ew, atol=1e-5, rtol=1e-5), (out_ew, ref_ew)

    # Non-integer gamma exercises the pow path (clamped base).
    out_g = jax.block_until_ready(focal_loss(logits, targets, gamma=1.5, elementwise=False))
    ref_g = _reference(logits, targets, gamma=1.5, elementwise=False)
    assert jnp.allclose(out_g, ref_g, atol=1e-5, rtol=1e-5), (out_g, ref_g)

    # bf16 logits + ragged batch: half-bandwidth HBM reads, 16-row sublane alignment,
    # and the in-kernel ragged-edge select (no wrapper-side pad anymore).
    N2, C2 = 13, 40
    logits2 = jax.random.normal(k3, (N2, C2), dtype=jnp.bfloat16)
    targets2 = jax.random.randint(k4, (N2,), 0, C2, dtype=jnp.int32)

    out2 = jax.block_until_ready(focal_loss(logits2, targets2, gamma=2.0, elementwise=False))
    ref2 = _reference(logits2, targets2, gamma=2.0, elementwise=False)
    assert jnp.allclose(out2, ref2, atol=1e-4, rtol=1e-4), (out2, ref2)

    out2_ew = jax.block_until_ready(
        focal_loss(logits2, targets2, gamma=2.0, elementwise=True))
    ref2_ew = _reference(logits2, targets2, gamma=2.0, elementwise=True)
    assert jnp.allclose(out2_ew, ref2_ew, atol=1e-4, rtol=1e-4), (out2_ew, ref2_ew)

    # Multi-tile + ragged last tile (f32): exercises the >=2-grid-step tiling rule,
    # the per-tile partial-sum output, and the edge mask, all without batch padding.
    N3, C3 = 50, 256
    logits3 = jax.random.normal(k5, (N3, C3), dtype=jnp.float32)
    targets3 = jax.random.randint(k6, (N3,), 0, C3, dtype=jnp.int32)

    out3 = jax.block_until_ready(focal_loss(logits3, targets3, gamma=2.0, elementwise=False))
    ref3 = _reference(logits3, targets3, gamma=2.0, elementwise=False)
    assert jnp.allclose(out3, ref3, atol=1e-5, rtol=1e-5), (out3, ref3)

    out3_ew = jax.block_until_ready(
        focal_loss(logits3, targets3, gamma=2.0, elementwise=True))
    ref3_ew = _reference(logits3, targets3, gamma=2.0, elementwise=True)
    assert jnp.allclose(out3_ew, ref3_ew, atol=1e-5, rtol=1e-5), (out3_ew, ref3_ew)

    print("KERNEL_OK")
</pallas_src>

<mosaic_0001>
module attributes {stable_mosaic.version = 11 : i64} {
  func.func @focal_kernel(%arg0: i32, %arg1: memref<8x32xf32, #tpu.memory_space<vmem>>, %arg2: memref<8x1xi32, #tpu.memory_space<vmem>>, %arg3: memref<1x8x128xf32, #tpu.memory_space<vmem>>) attributes {dimension_semantics = [#tpu.dimension_semantics<parallel>], iteration_bounds = array<i64: 1>, scalar_prefetch = 0 : i64, scratch_operands = 0 : i64, tpu.core_type = #tpu.core_type<tc>, window_params = [{transform_indices = @transform_0, window_bounds = array<i64: 8, 32>}, {transform_indices = @transform_1, window_bounds = array<i64: 8, 1>}, {transform_indices = @transform_2, window_bounds = array<i64: 1, 8, 128>}]} {
    %c0 = arith.constant 0 : index
    %c0_0 = arith.constant 0 : index
    %0 = vector.load %arg1[%c0, %c0_0] : memref<8x32xf32, #tpu.memory_space<vmem>>, vector<8x32xf32>
    %c0_1 = arith.constant 0 : index
    %c0_2 = arith.constant 0 : index
    %1 = vector.load %arg2[%c0_1, %c0_2] : memref<8x1xi32, #tpu.memory_space<vmem>>, vector<8x1xi32>
    %cst = arith.constant dense<0xFF800000> : vector<8xf32>
    %2 = vector.multi_reduction <maximumf>, %0, %cst [1] : vector<8x32xf32> to vector<8xf32>
    %3 = vector.shape_cast %2 : vector<8xf32> to vector<8x1xf32>
    %4 = vector.broadcast %3 : vector<8x1xf32> to vector<8x32xf32>
    %5 = arith.subf %0, %4 : vector<8x32xf32>
    %6 = math.exp %5 : vector<8x32xf32>
    %cst_3 = arith.constant dense<0.000000e+00> : vector<8xf32>
    %7 = vector.multi_reduction <add>, %6, %cst_3 [1] : vector<8x32xf32> to vector<8xf32>
    %8 = vector.shape_cast %7 : vector<8xf32> to vector<8x1xf32>
    %9 = tpu.iota {dimensions = array<i32: 1>} : vector<8x32xi32>
    %10 = vector.broadcast %1 : vector<8x1xi32> to vector<8x32xi32>
    %11 = arith.cmpi eq, %9, %10 : vector<8x32xi32>
    %cst_4 = arith.constant 0.000000e+00 : f32
    %12 = vector.broadcast %cst_4 : f32 to vector<8x32xf32>
    %13 = arith.select %11, %0, %12 : vector<8x32xi1>, vector<8x32xf32>
    %cst_5 = arith.constant dense<0.000000e+00> : vector<8xf32>
    %14 = vector.multi_reduction <add>, %13, %cst_5 [1] : vector<8x32xf32> to vector<8xf32>
    %15 = vector.shape_cast %14 : vector<8xf32> to vector<8x1xf32>
    %16 = math.log %8 : vector<8x1xf32>
    %17 = arith.addf %16, %3 : vector<8x1xf32>
    %18 = arith.subf %17, %15 : vector<8x1xf32>
    %cst_6 = arith.constant 0.000000e+00 : f32
    %19 = vector.broadcast %cst_6 : f32 to vector<8x1xf32>
    %20 = arith.maximumf %18, %19 : vector<8x1xf32>
    %cst_7 = arith.constant 0.000000e+00 : f32
    %21 = vector.broadcast %cst_7 : f32 to vector<8x1xf32>
    %22 = arith.subf %21, %20 : vector<8x1xf32>
    %23 = math.exp %22 : vector<8x1xf32>
    %cst_8 = arith.constant 1.000000e+00 : f32
    %24 = vector.broadcast %cst_8 : f32 to vector<8x1xf32>
    %25 = arith.subf %24, %23 : vector<8x1xf32>
    %cst_9 = arith.constant 0.000000e+00 : f32
    %26 = vector.broadcast %cst_9 : f32 to vector<8x1xf32>
    %27 = arith.maximumf %25, %26 : vector<8x1xf32>
    %28 = arith.mulf %27, %27 : vector<8x1xf32>
    %29 = arith.mulf %28, %20 : vector<8x1xf32>
    %30 = vector.shape_cast %29 : vector<8x1xf32> to vector<1x8x1xf32>
    %cst_10 = arith.constant dense<0.000000e+00> : vector<1xf32>
    %31 = vector.multi_reduction <add>, %30, %cst_10 [1, 2] : vector<1x8x1xf32> to vector<1xf32>
    %32 = vector.shape_cast %31 : vector<1xf32> to vector<1x1x1xf32>
    %33 = vector.extract %32[0, 0, 0] : f32 from vector<1x1x1xf32>
    %34 = vector.broadcast %33 : f32 to vector<1x8x128xf32>
    %c0_11 = arith.constant 0 : index
    %c0_12 = arith.constant 0 : index
    %c0_13 = arith.constant 0 : index
    %35 = vector.load %arg3[%c0_11, %c0_12, %c0_13] : memref<1x8x128xf32, #tpu.memory_space<vmem>>, vector<1x8x128xf32>
    tpu.vector_store %arg3[%c0_11, %c0_12, %c0_13], %34 {strides = array<i32>} : memref<1x8x128xf32, #tpu.memory_space<vmem>>, vector<1x8x128xf32>,
    return
  }
  func.func @transform_0(%arg0: i32) -> (i32, i32) {
    %c0_i32 = arith.constant 0 : i32
    %c0_i32_0 = arith.constant 0 : i32
    return %arg0, %c0_i32 : i32, i32
  }
  func.func @transform_1(%arg0: i32) -> (i32, i32) {
    %c0_i32 = arith.constant 0 : i32
    %c0_i32_0 = arith.constant 0 : i32
    return %arg0, %c0_i32 : i32, i32
  }
  func.func @transform_2(%arg0: i32) -> (i32, i32, i32) {
    %c0_i32 = arith.constant 0 : i32
    %c0_i32_0 = arith.constant 0 : i32
    %c0_i32_1 = arith.constant 0 : i32
    return %arg0, %c0_i32, %c0_i32_0 : i32, i32, i32
  }
}

</mosaic_0001>

<llo_original>
// kernel: focal_loss.1
$region0: #{focal_loss.1}
  #allocation0 [shape = 'u32[]', space=smem, size = 0x4, offset = 0x4, fixed_abs, tag = 'smem constant byte address 0x4 - core index']
  #allocation1 [shape = 'u32[144,128]{1,0:T(1,128)}', space=vmem, size = 0x12000, scoped, tag = 'internal scratch']
  %s0 = inlined_call_operand.vmem [shape: f32[8,32], index: 0, kind: input, shape index: {}]
  %s1 = inlined_call_operand.vmem [shape: s32[8,1], index: 1, kind: input, shape index: {}]
  %s2 = inlined_call_operand.vmem [shape: f32[1,8,128], index: 2, kind: output, shape index: {}]
  %s3 = sld [smem:[#allocation0]]
  $region18: #{focal_loss.1} parent=0
    _
  %s5 = ssub.s32 1, %s3
  %s6 = scalar_select 0, %s5, %s3
  // Predicated region
  $region2: #{focal_loss.1} parent=0 // pred_check
    _
  $region3: #{focal_loss.1} parent=0 // pred_check_branch
    %8 = sbr.rel (0) target = $region5
  $region4: #{focal_loss.1} parent=0 // pred_region
    _
  $region5: #{focal_loss.1} parent=0 // pred_fallthru
    _
  // Predicated region
  $region6: #{focal_loss.1} parent=0 // pred_check
    _
  $region7: #{focal_loss.1} parent=0 // pred_check_branch
    %10 = sbr.rel (0) target = $region9
  $region8: #{focal_loss.1} parent=0 // pred_region
    _
  $region9: #{focal_loss.1} parent=0 // pred_fallthru
    _
  %v11 = vld [vmem:[%s0] sm:$0xff]
  %v12 = vld [vmem:[%s1] sm:$0xff]
  %vm13 = vcmask 261120
  %v14 = vsel %vm13, %v11, -inf
  %15 = vmax.xlane.f32.xlu0 %v14
  %v16 = vpop.xlane.xlu0 %15
  %v17 = vsub.f32 %v11, %v16
  %v18 = vmul.f32 %v17, 1.442695
  %v19 = vpow.pop %v18
  %v20 = vsel %vm13, %v19, 0.0
  %21 = vadd.xlane.f32.xlu0 %v20
  %v22 = vpop.xlane.xlu0 %21
  %v23 = vlaneseq
  %v24 = vand.u32 %v23, 127
  %25 = vset.pattern.permute.xlu0 0
  %26 = vperm.xlu0 %25, %v12
  %v27 = vpop.permute.xlu0 %26
  %vm28 = vcmp.eq.s32.totalorder %v24, %v27
  %v29 = vsel %vm28, %v11, 0.0
  %v30 = vsel %vm13, %v29, 0.0
  %31 = vadd.xlane.f32.xlu0 %v30
  %v32 = vpop.xlane.xlu0 %31
  %v33 = vlog2.pop %v22
  %v34 = vmul.f32 %v33, 0.6931472
  %v35 = vadd.f32 %v34, %v16
  %v36 = vsub.f32 %v35, %v32
  %v37 = vmax.f32 %v36, 0.0
  %v38 = vsub.f32 0.0, %v37
  %v39 = vmul.f32 %v38, 1.442695
  %v40 = vpow.pop %v39
  %v41 = vsub.f32 1.0, %v40
  %v42 = vmax.f32 %v41, 0.0
  %v43 = vmul.f32 %v42, %v42
  %v44 = vmul.f32 %v43, %v37
  %vm45 = vcmask 7168
  %v46 = vsel %vm45, %v44, 0.0
  %47 = vadd.xlane.f32.xlu0 %v46
  %v48 = vpop.xlane.xlu0 %47
  %v49 = vrot.slane %v48, 4
  %v50 = vadd.f32 %v48, %v49
  %v51 = vrot.slane %v50, 2
  %v52 = vadd.f32 %v50, %v51
  %v53 = vrot.slane %v52, 1
  %v54 = vadd.f32 %v52, %v53
  %s55 = vtos %v54
  %v56 = vstv %s55
  %57 = vst [vmem:[%s2] sm:$0xff] %v56
  // Predicated region
  $region10: #{focal_loss.1} parent=0 // pred_check
    _
  $region11: #{focal_loss.1} parent=0 // pred_check_branch
    %59 = sbr.rel (0) target = $region13
  $region12: #{focal_loss.1} parent=0 // pred_region
    _
  $region13: #{focal_loss.1} parent=0 // pred_fallthru
    _
  // Predicated region
  $region14: #{focal_loss.1} parent=0 // pred_check
    _
  $region15: #{focal_loss.1} parent=0 // pred_check_branch
    %61 = sbr.rel (0) target = $region17
  $region16: #{focal_loss.1} parent=0 // pred_region
    _
  $region17: #{focal_loss.1} parent=0 // pred_fallthru
    _

</llo_original>
